<compile_context>
chip_gen: v7x
topology: tpu7x:2x2x1
jax: 0.10.0
libtpu: 0.0.40
codegen_flags: <defaults>
</compile_context>

<pallas_src>
import math

import jax
import jax.numpy as jnp
from jax.experimental import pallas as pl
from jax.experimental.pallas import tpu as pltpu

_LANE = 128
_SUBLANE = 8


def _round_up(x, m):
    return ((x + m - 1) // m) * m


def _make_mlp_kernel(num_layers, tanh_temp):
    """Kernel computing the full MLP + tanh(temp * .) for `num_layers` Linear layers."""

    def kernel(x_ref, *refs):
        # refs layout: w0, b0, w1, b1, ..., w_{L-1}, b_{L-1}, out_ref
        out_ref = refs[-1]
        h = x_ref[...]                                    # (rows_tile, d_in) compute dtype
        for layer in range(num_layers):
            w = refs[2 * layer][...]
            b = refs[2 * layer + 1][...]                  # (1, D_out) f32, broadcasts over rows
            # MXU matmul in the weight dtype (f32 or bf16), always f32 accumulation.
            h = jnp.dot(h.astype(w.dtype), w, preferred_element_type=jnp.float32)
            h = h + b.astype(jnp.float32)
            if layer < num_layers - 1:                    # ReLU on all but the last Linear
                h = jnp.maximum(h, 0.0)
            else:
                h = jnp.tanh(tanh_temp * h)               # EUP tanh, f32
        out_ref[...] = h.astype(out_ref.dtype)

    return kernel


def hashcode_trainer_forward(fmaps, weights, biases, tanh_temp,
                             block_rows=256,
                             compute_dtype=jnp.float32,
                             out_dtype=jnp.float32):
    """
    fmaps   : (N, D_in) float32
    weights : list of (D_in_i, D_out_i) float32   (x @ W + b, i.e. torch x @ W.T layout)
    biases  : list of (D_out_i,) float32
    Returns : (N, D_out_last) out_dtype = tanh(tanh_temp * MLP(fmaps))
    """
    N, d_in = fmaps.shape
    num_layers = len(weights)
    d_out = weights[-1].shape[1]

    # Lane-dense output slab: pad the final output dim up to a multiple of 128.
    d_out_p = _round_up(d_out, _LANE)

    # Row tiling: fixed tile (multiple of 8, capped by N); pad N up to the tile.
    block_rows = max(_SUBLANE, _round_up(min(block_rows, N), _SUBLANE))
    n_pad = _round_up(N, block_rows)
    grid = (n_pad // block_rows,)

    x = fmaps.astype(compute_dtype)
    if n_pad != N:
        x = jnp.pad(x, ((0, n_pad - N), (0, 0)))

    ws = [w.astype(compute_dtype) for w in weights]
    bs = [b.astype(jnp.float32).reshape(1, -1) for b in biases]
    if d_out_p != d_out:
        ws[-1] = jnp.pad(ws[-1], ((0, 0), (0, d_out_p - d_out)))
        bs[-1] = jnp.pad(bs[-1], ((0, 0), (0, d_out_p - d_out)))

    kernel = _make_mlp_kernel(num_layers, float(tanh_temp))

    # Rows tile streams over the grid; params are full-array blocks with a constant
    # block index -> VMEM-resident across grid steps (no per-step re-DMA).
    in_specs = [pl.BlockSpec((block_rows, d_in), lambda i: (i, 0))]
    param_args = []
    for w, b in zip(ws, bs):
        in_specs.append(pl.BlockSpec(w.shape, lambda i: (0, 0)))
        in_specs.append(pl.BlockSpec(b.shape, lambda i: (0, 0)))
        param_args.extend([w, b])

    out_spec = pl.BlockSpec((block_rows, d_out_p), lambda i: (i, 0))

    # Advisory cost for XLA scheduling around the custom call.
    dims = [d_in] + [w.shape[1] for w in weights]
    flops = 2 * N * sum(a * b for a, b in zip(dims, dims[1:]))
    param_bytes = sum(int(w.size) * w.dtype.itemsize for w in ws) \
        + sum(int(b.size) * 4 for b in bs)
    bytes_accessed = (int(x.size) * x.dtype.itemsize
                      + n_pad * d_out_p * jnp.dtype(out_dtype).itemsize
                      + param_bytes)
    cost = pl.CostEstimate(flops=flops,
                           transcendentals=N * d_out,
                           bytes_accessed=bytes_accessed)

    fn = pl.pallas_call(
        kernel,
        out_shape=jax.ShapeDtypeStruct((n_pad, d_out_p), out_dtype),
        grid_spec=pltpu.PrefetchScalarGridSpec(
            num_scalar_prefetch=0,
            grid=grid,
            in_specs=in_specs,
            out_specs=out_spec,
        ),
        compiler_params=pltpu.CompilerParams(
            dimension_semantics=("parallel",),
        ),
        cost_estimate=cost,
    )
    out = fn(x, *param_args)
    return out[:N, :d_out]


def init_linear_params(key, d_in, d_out):
    """Deterministic init mimicking torch.nn.Linear default (uniform +-1/sqrt(fan_in))."""
    kw, kb = jax.random.split(key)
    bound = 1.0 / math.sqrt(d_in)
    w = jax.random.uniform(kw, (d_in, d_out), jnp.float32, -bound, bound)
    b = jax.random.uniform(kb, (d_out,), jnp.float32, -bound, bound)
    return w, b


def reference_forward(fmaps, weights, biases, tanh_temp):
    h = fmaps
    for i, (w, b) in enumerate(zip(weights, biases)):
        h = h @ w + b
        if i < len(weights) - 1:
            h = jnp.maximum(h, 0.0)
    return jnp.tanh(tanh_temp * h)


if __name__ == "__main__":
    # Config consistent with hashing.name == 'RH_Trained':
    #   inner_hs = [embed_dim] + hidden_layers + [hcode_dim]
    embed_dim = 32
    hidden_layers = [64]
    hcode_dim = 16
    TANH_TEMP = 2.0
    inner_hs = [embed_dim] + hidden_layers + [hcode_dim]

    key = jax.random.PRNGKey(0)
    keys = jax.random.split(key, len(inner_hs))  # last key for input

    weights, biases = [], []
    for idx, (d0, d1) in enumerate(zip(inner_hs, inner_hs[1:])):
        w, b = init_linear_params(keys[idx], d0, d1)
        weights.append(w)
        biases.append(b)

    # 1) Small batch, f32 MXU path (single grid step).
    N = 8
    fmaps = jax.random.normal(keys[-1], (N, embed_dim), jnp.float32)
    out = jax.block_until_ready(
        hashcode_trainer_forward(fmaps, weights, biases, TANH_TEMP))
    ref = reference_forward(fmaps, weights, biases, TANH_TEMP)
    assert out.shape == (N, hcode_dim)
    assert jnp.allclose(out, ref, atol=1e-4, rtol=1e-4)

    # 2) Ragged batch exercising row tiling (grid > 1, padded rows sliced off),
    #    bf16 MXU-operand path (halved HBM traffic / faster MXU on v6e/v7x),
    #    f32 accumulation + activations, f32 output.
    N2 = 300
    fmaps2 = jax.random.normal(jax.random.PRNGKey(7), (N2, embed_dim), jnp.float32)
    ref2 = reference_forward(fmaps2, weights, biases, TANH_TEMP)
    out2 = jax.block_until_ready(
        hashcode_trainer_forward(fmaps2, weights, biases, TANH_TEMP,
                                 block_rows=128, compute_dtype=jnp.bfloat16))
    assert out2.shape == (N2, hcode_dim)
    assert jnp.allclose(out2, ref2, atol=5e-2, rtol=5e-2)

    print("KERNEL_OK")
</pallas_src>

<mosaic_0001>
module attributes {stable_mosaic.version = 11 : i64} {
  func.func @kernel(%arg0: i32, %arg1: memref<8x32xf32, #tpu.memory_space<vmem>>, %arg2: memref<32x64xf32, #tpu.memory_space<vmem>>, %arg3: memref<1x64xf32, #tpu.memory_space<vmem>>, %arg4: memref<64x128xf32, #tpu.memory_space<vmem>>, %arg5: memref<1x128xf32, #tpu.memory_space<vmem>>, %arg6: memref<8x128xf32, #tpu.memory_space<vmem>>) attributes {dimension_semantics = [#tpu.dimension_semantics<parallel>], iteration_bounds = array<i64: 1>, scalar_prefetch = 0 : i64, scratch_operands = 0 : i64, tpu.core_type = #tpu.core_type<tc>, window_params = [{transform_indices = @transform_0, window_bounds = array<i64: 8, 32>}, {pipeline_mode = #tpu.pipeline_mode<synchronous>, transform_indices = @transform_1, window_bounds = array<i64: 32, 64>}, {pipeline_mode = #tpu.pipeline_mode<synchronous>, transform_indices = @transform_2, window_bounds = array<i64: 1, 64>}, {pipeline_mode = #tpu.pipeline_mode<synchronous>, transform_indices = @transform_3, window_bounds = array<i64: 64, 128>}, {pipeline_mode = #tpu.pipeline_mode<synchronous>, transform_indices = @transform_4, window_bounds = array<i64: 1, 128>}, {transform_indices = @transform_5, window_bounds = array<i64: 8, 128>}]} {
    %c0 = arith.constant 0 : index
    %c0_0 = arith.constant 0 : index
    %0 = vector.load %arg1[%c0, %c0_0] : memref<8x32xf32, #tpu.memory_space<vmem>>, vector<8x32xf32>
    %c0_1 = arith.constant 0 : index
    %c0_2 = arith.constant 0 : index
    %1 = vector.load %arg2[%c0_1, %c0_2] : memref<32x64xf32, #tpu.memory_space<vmem>>, vector<32x64xf32>
    %c0_3 = arith.constant 0 : index
    %c0_4 = arith.constant 0 : index
    %2 = vector.load %arg3[%c0_3, %c0_4] : memref<1x64xf32, #tpu.memory_space<vmem>>, vector<1x64xf32>
    %cst = arith.constant dense<0.000000e+00> : vector<8x64xf32>
    %3 = tpu.matmul %0, %1, %cst {dimension_numbers = #tpu.dot_dimension_numbers<[1], [0], [0], [1], [0, 0, 1, 1], [], []>} : vector<8x32xf32>, vector<32x64xf32>, vector<8x64xf32> -> vector<8x64xf32>
    %4 = vector.broadcast %2 : vector<1x64xf32> to vector<8x64xf32>
    %5 = arith.addf %3, %4 : vector<8x64xf32>
    %cst_5 = arith.constant 0.000000e+00 : f32
    %6 = vector.broadcast %cst_5 : f32 to vector<8x64xf32>
    %7 = arith.maximumf %5, %6 : vector<8x64xf32>
    %c0_6 = arith.constant 0 : index
    %c0_7 = arith.constant 0 : index
    %8 = vector.load %arg4[%c0_6, %c0_7] : memref<64x128xf32, #tpu.memory_space<vmem>>, vector<64x128xf32>
    %c0_8 = arith.constant 0 : index
    %c0_9 = arith.constant 0 : index
    %9 = vector.load %arg5[%c0_8, %c0_9] : memref<1x128xf32, #tpu.memory_space<vmem>>, vector<1x128xf32>
    %cst_10 = arith.constant dense<0.000000e+00> : vector<8x128xf32>
    %10 = tpu.matmul %7, %8, %cst_10 {dimension_numbers = #tpu.dot_dimension_numbers<[1], [0], [0], [1], [0, 0, 1, 1], [], []>} : vector<8x64xf32>, vector<64x128xf32>, vector<8x128xf32> -> vector<8x128xf32>
    %11 = vector.broadcast %9 : vector<1x128xf32> to vector<8x128xf32>
    %12 = arith.addf %10, %11 : vector<8x128xf32>
    %cst_11 = arith.constant 2.000000e+00 : f32
    %13 = vector.broadcast %cst_11 : f32 to vector<8x128xf32>
    %14 = arith.mulf %13, %12 : vector<8x128xf32>
    %15 = math.tanh %14 : vector<8x128xf32>
    %c0_12 = arith.constant 0 : index
    %c0_13 = arith.constant 0 : index
    %16 = vector.load %arg6[%c0_12, %c0_13] : memref<8x128xf32, #tpu.memory_space<vmem>>, vector<8x128xf32>
    tpu.vector_store %arg6[%c0_12, %c0_13], %15 {strides = array<i32>} : memref<8x128xf32, #tpu.memory_space<vmem>>, vector<8x128xf32>,
    return
  }
  func.func @transform_0(%arg0: i32) -> (i32, i32) {
    %c0_i32 = arith.constant 0 : i32
    %c0_i32_0 = arith.constant 0 : i32
    return %arg0, %c0_i32 : i32, i32
  }
  func.func @transform_1(%arg0: i32) -> (i32, i32) {
    %c0_i32 = arith.constant 0 : i32
    %c0_i32_0 = arith.constant 0 : i32
    %c0_i32_1 = arith.constant 0 : i32
    return %c0_i32, %c0_i32_0 : i32, i32
  }
  func.func @transform_2(%arg0: i32) -> (i32, i32) {
    %c0_i32 = arith.constant 0 : i32
    %c0_i32_0 = arith.constant 0 : i32
    %c0_i32_1 = arith.constant 0 : i32
    return %c0_i32, %c0_i32_0 : i32, i32
  }
  func.func @transform_3(%arg0: i32) -> (i32, i32) {
    %c0_i32 = arith.constant 0 : i32
    %c0_i32_0 = arith.constant 0 : i32
    %c0_i32_1 = arith.constant 0 : i32
    return %c0_i32, %c0_i32_0 : i32, i32
  }
  func.func @transform_4(%arg0: i32) -> (i32, i32) {
    %c0_i32 = arith.constant 0 : i32
    %c0_i32_0 = arith.constant 0 : i32
    %c0_i32_1 = arith.constant 0 : i32
    return %c0_i32, %c0_i32_0 : i32, i32
  }
  func.func @transform_5(%arg0: i32) -> (i32, i32) {
    %c0_i32 = arith.constant 0 : i32
    %c0_i32_0 = arith.constant 0 : i32
    return %arg0, %c0_i32 : i32, i32
  }
}

</mosaic_0001>

<llo_original>
// kernel: tpu_custom_call.1
$region0: #{tpu_custom_call.1}
  #allocation0 [shape = 'u32[]', space=smem, size = 0x4, offset = 0x4, fixed_abs, tag = 'smem constant byte address 0x4 - core index']
  #allocation1 [shape = 'u32[144,128]{1,0:T(1,128)}', space=vmem, size = 0x12000, scoped, tag = 'internal scratch']
  %s0 = inlined_call_operand.hbm [shape: f32[8,32], index: 0, kind: input, shape index: {}]
  %s1 = inlined_call_operand.hbm [shape: f32[32,64], index: 1, kind: input, shape index: {}]
  %s2 = inlined_call_operand.vmem [shape: f32[1,64], index: 2, kind: input, shape index: {}]
  %s3 = inlined_call_operand.hbm [shape: f32[64,128], index: 3, kind: input, shape index: {}]
  %s4 = inlined_call_operand.vmem [shape: f32[1,128], index: 4, kind: input, shape index: {}]
  %s5 = inlined_call_operand.hbm [shape: f32[8,128], index: 5, kind: output, shape index: {}]
  %s6 = sld [smem:[#allocation0]]
  $region42: #{tpu_custom_call.1} parent=0
    _
  %s8 = ssub.s32 1, %s6
  %s9 = scalar_select 0, %s8, %s6
  $region1: #{tpu_custom_call.1} parent=0
    #allocation2 [shape = 'u8[4096]{0}', space=vmem, size = 0x1000, scoped, tag = 'input window, operand 0, single buffered']
    #allocation3 [shape = 's32[1]{0}', space=sflag, size = 0x4, scoped, tag = 'scoped memory for tpu_custom_call.1']
    #allocation4 [shape = 's32[1]{0}', space=sflag, size = 0x4, scoped, tag = 'scoped memory for tpu_custom_call.1']
    #allocation5 [shape = 'u8[16384]{0}', space=vmem, size = 0x4000, scoped, tag = 'input window, operand 1, single buffered']
    #allocation6 [shape = 's32[1]{0}', space=sflag, size = 0x4, scoped, tag = 'scoped memory for tpu_custom_call.1']
    #allocation7 [shape = 'u8[32768]{0}', space=vmem, size = 0x8000, scoped, tag = 'input window, operand 3, single buffered']
    #allocation8 [shape = 'u8[4096]{0}', space=vmem, size = 0x1000, scoped, tag = 'output window, operand 0, single buffered']
    %10 = vsyncpa [#allocation3], 0
    %11 = vsyncpa [#allocation6], 0
    %12 = vsyncpa [#allocation4], 0
    // Predicated region
    $region2: #{tpu_custom_call.1} parent=1 // pred_check
      _
    $region3: #{tpu_custom_call.1} parent=1 // pred_check_branch
      %14 = sbr.rel (0) target = $region5
    $region4: #{tpu_custom_call.1} parent=1 // pred_region
      %s16 = ssub.s32 128, 128
      %17 = vsyncadd [#allocation3], %s16
      %s19 = sshll.u32 [#allocation2], 4
      %s20 = int_to_ptr.vmem [resolvable:$true] %s19
      %22 = dma.hbm_to_vmem [thread:$0]  %s0, 128, %s20, [#allocation3]
    $region5: #{tpu_custom_call.1} parent=1 // pred_fallthru
      _
    // Predicated region
    $region6: #{tpu_custom_call.1} parent=1 // pred_check
      _
    $region7: #{tpu_custom_call.1} parent=1 // pred_check_branch
      %24 = sbr.rel (0) target = $region9
    $region8: #{tpu_custom_call.1} parent=1 // pred_region
      %s26 = ssub.s32 512, 512
      %27 = vsyncadd [#allocation6], %s26
      %s28 = sshll.u32 [#allocation5], 4
      %s29 = int_to_ptr.vmem [resolvable:$true] %s28
      %34 = dma.hbm_to_vmem [thread:$0]  %s1, 512, %s29, [#allocation6], 128, 128, 8
    $region9: #{tpu_custom_call.1} parent=1 // pred_fallthru
      _
    // Predicated region
    $region10: #{tpu_custom_call.1} parent=1 // pred_check
      _
    $region11: #{tpu_custom_call.1} parent=1 // pred_check_branch
      %36 = sbr.rel (0) target = $region13
    $region12: #{tpu_custom_call.1} parent=1 // pred_region
      _
    $region13: #{tpu_custom_call.1} parent=1 // pred_fallthru
      _
    // Predicated region
    $region14: #{tpu_custom_call.1} parent=1 // pred_check
      _
    $region15: #{tpu_custom_call.1} parent=1 // pred_check_branch
      %38 = sbr.rel (0) target = $region17
    $region16: #{tpu_custom_call.1} parent=1 // pred_region
      %s40 = ssub.s32 1024, 1024
      %41 = vsyncadd [#allocation6], %s40
      %s42 = sshll.u32 [#allocation7], 4
      %s43 = int_to_ptr.vmem [resolvable:$true] %s42
      %48 = dma.hbm_to_vmem [thread:$0]  %s3, 1024, %s43, [#allocation6], 128, 128, 8
    $region17: #{tpu_custom_call.1} parent=1 // pred_fallthru
      _
    // Predicated region
    $region18: #{tpu_custom_call.1} parent=1 // pred_check
      _
    $region19: #{tpu_custom_call.1} parent=1 // pred_check_branch
      %50 = sbr.rel (0) target = $region21
    $region20: #{tpu_custom_call.1} parent=1 // pred_region
      _
    $region21: #{tpu_custom_call.1} parent=1 // pred_fallthru
      _
    // Predicated region
    $region22: #{tpu_custom_call.1} parent=1 // pred_check
      _
    $region23: #{tpu_custom_call.1} parent=1 // pred_check_branch
      %52 = sbr.rel (0) target = $region25
    $region24: #{tpu_custom_call.1} parent=1 // pred_region
      %53 = dma.done [#allocation3], 128
    $region25: #{tpu_custom_call.1} parent=1 // pred_fallthru
      _
    // Predicated region
    $region26: #{tpu_custom_call.1} parent=1 // pred_check
      _
    $region27: #{tpu_custom_call.1} parent=1 // pred_check_branch
      %55 = sbr.rel (0) target = $region29
    $region28: #{tpu_custom_call.1} parent=1 // pred_region
      %56 = dma.done [#allocation6], 512
    $region29: #{tpu_custom_call.1} parent=1 // pred_fallthru
      _
    // Predicated region
    $region30: #{tpu_custom_call.1} parent=1 // pred_check
      _
    $region31: #{tpu_custom_call.1} parent=1 // pred_check_branch
      %58 = sbr.rel (0) target = $region33
    $region32: #{tpu_custom_call.1} parent=1 // pred_region
      %59 = dma.done [#allocation6], 1024
    $region33: #{tpu_custom_call.1} parent=1 // pred_fallthru
      _
    %v60 = vld [vmem:[#allocation2] sm:$0xff]
    %v61 = vld [vmem:[#allocation5] sm:$0xff]
    %v62 = vld [vmem:[#allocation5 + $0x8] sm:$0xff]
    %v63 = vld [vmem:[#allocation5 + $0x10] sm:$0xff]
    %v64 = vld [vmem:[#allocation5 + $0x18] sm:$0xff]
    %v65 = vld [vmem:[%s2] sm:$0x1]
    %v67 = vlaneseq
    %v68 = vshrl.u32 %v67, 7
    %v69 = vsub.s32 0, %v68
    %v70 = vrot.slane %v65, %v69
    %vm72 = vcmask 261120
    %v74 = vsel %vm72, %v60, 0
    %76 = vmatprep.subr.mxu0 0.0
    %77 = vmatpush1.msra.mxu0 %v61
    %78 = vmatprep.subr.mxu0 0.0
    %79 = vmatpush1.msra.mxu0 %v62
    %80 = vmatprep.subr.mxu0 0.0
    %81 = vmatpush1.msra.mxu0 %v63
    %82 = vmatprep.subr.mxu0 0.0
    %83 = vmatpush1.msra.mxu0 %v64
    %84 = vmatprep.subr.mxu0 0.0
    %85 = vmatpush1.msra.mxu0 0.0
    %86 = vmatprep.subr.mxu0 0.0
    %87 = vmatpush1.msra.mxu0 0.0
    %88 = vmatprep.subr.mxu0 0.0
    %89 = vmatpush1.msra.mxu0 0.0
    %90 = vmatprep.subr.mxu0 0.0
    %91 = vmatpush1.msra.mxu0 0.0
    %92 = vmatprep.subr.mxu0 0.0
    %93 = vmatpush1.msra.mxu0 0.0
    %94 = vmatprep.subr.mxu0 0.0
    %95 = vmatpush1.msra.mxu0 0.0
    %96 = vmatprep.subr.mxu0 0.0
    %97 = vmatpush1.msra.mxu0 0.0
    %98 = vmatprep.subr.mxu0 0.0
    %99 = vmatpush1.msra.mxu0 0.0
    %100 = vmatprep.subr.mxu0 0.0
    %101 = vmatpush1.msra.mxu0 0.0
    %102 = vmatprep.subr.mxu0 0.0
    %103 = vmatpush1.msra.mxu0 0.0
    %104 = vmatprep.subr.mxu0 0.0
    %105 = vmatpush1.msra.mxu0 0.0
    %106 = vmatprep.subr.mxu0 0.0
    %107 = vmatpush1.msra.mxu0 0.0
    %108 = vmatprep.subr.mxu0 0.0
    %109 = vmatpush1.msra.mxu0 0.0
    %110 = vmatprep.subr.mxu0 0.0
    %111 = vmatpush1.msra.mxu0 0.0
    %112 = vmatprep.subr.mxu0 0.0
    %113 = vmatpush1.msra.mxu0 0.0
    %114 = vmatprep.subr.mxu0 0.0
    %115 = vmatpush1.msra.mxu0 0.0
    %116 = vmatprep.subr.mxu0 0.0
    %117 = vmatpush1.msra.mxu0 0.0
    %118 = vmatprep.subr.mxu0 0.0
    %119 = vmatpush1.msra.mxu0 0.0
    %120 = vmatprep.subr.mxu0 0.0
    %121 = vmatpush1.msra.mxu0 0.0
    %122 = vmatprep.subr.mxu0 0.0
    %123 = vmatpush1.msra.mxu0 0.0
    %124 = vmatprep.subr.mxu0 0.0
    %125 = vmatpush1.msra.mxu0 0.0
    %126 = vmatprep.subr.mxu0 0.0
    %127 = vmatpush1.msra.mxu0 0.0
    %128 = vmatprep.subr.mxu0 0.0
    %129 = vmatpush1.msra.mxu0 0.0
    %130 = vmatprep.subr.mxu0 0.0
    %131 = vmatpush1.msra.mxu0 0.0
    %132 = vmatprep.subr.mxu0 0.0
    %133 = vmatpush1.msra.mxu0 0.0
    %134 = vmatprep.subr.mxu0 0.0
    %135 = vmatpush1.msra.mxu0 0.0
    %136 = vmatprep.subr.mxu0 0.0
    %137 = vmatpush1.msra.mxu0 0.0
    %138 = vmatprep.subr.mxu0 0.0
    %139 = vmatpush1.msra.mxu0 0.0
    %140 = vmatprep.mubr.f32.mxu0 0.0
    %141 = vmatmul.mubr.f32.gmra.mrb[0].mxu0 %v74
    %v142 = vpop.f32.mrb[0].mxu0
    %v143 = vadd.f32 %v70, %v142
    %v144 = vpop.f32.mrb[0].mxu0
    %145 = vdwg.mxu0
    %v146 = vmax.f32 %v143, 0.0
    %v147 = vld [vmem:[#allocation7] sm:$0xff]
    %v148 = vld [vmem:[#allocation7 + $0x8] sm:$0xff]
    %v149 = vld [vmem:[#allocation7 + $0x10] sm:$0xff]
    %v150 = vld [vmem:[#allocation7 + $0x18] sm:$0xff]
    %v151 = vld [vmem:[#allocation7 + $0x20] sm:$0xff]
    %v152 = vld [vmem:[#allocation7 + $0x28] sm:$0xff]
    %v153 = vld [vmem:[#allocation7 + $0x30] sm:$0xff]
    %v154 = vld [vmem:[#allocation7 + $0x38] sm:$0xff]
    %v155 = vld [vmem:[%s4] sm:$0x1]
    %v157 = vlaneseq
    %v158 = vshrl.u32 %v157, 7
    %v159 = vsub.s32 0, %v158
    %v160 = vrot.slane %v155, %v159
    %vm162 = vcmask 523264
    %v164 = vsel %vm162, %v146, 0
    %166 = vmatprep.subr.mxu0 0.0
    %167 = vmatpush1.msra.mxu0 %v147
    %168 = vmatprep.subr.mxu0 0.0
    %169 = vmatpush1.msra.mxu0 %v148
    %170 = vmatprep.subr.mxu0 0.0
    %171 = vmatpush1.msra.mxu0 %v149
    %172 = vmatprep.subr.mxu0 0.0
    %173 = vmatpush1.msra.mxu0 %v150
    %174 = vmatprep.subr.mxu0 0.0
    %175 = vmatpush1.msra.mxu0 %v151
    %176 = vmatprep.subr.mxu0 0.0
    %177 = vmatpush1.msra.mxu0 %v152
    %178 = vmatprep.subr.mxu0 0.0
    %179 = vmatpush1.msra.mxu0 %v153
    %180 = vmatprep.subr.mxu0 0.0
    %181 = vmatpush1.msra.mxu0 %v154
    %182 = vmatprep.subr.mxu0 0.0
    %183 = vmatpush1.msra.mxu0 0.0
    %184 = vmatprep.subr.mxu0 0.0
    %185 = vmatpush1.msra.mxu0 0.0
    %186 = vmatprep.subr.mxu0 0.0
    %187 = vmatpush1.msra.mxu0 0.0
    %188 = vmatprep.subr.mxu0 0.0
    %189 = vmatpush1.msra.mxu0 0.0
    %190 = vmatprep.subr.mxu0 0.0
    %191 = vmatpush1.msra.mxu0 0.0
    %192 = vmatprep.subr.mxu0 0.0
    %193 = vmatpush1.msra.mxu0 0.0
    %194 = vmatprep.subr.mxu0 0.0
    %195 = vmatpush1.msra.mxu0 0.0
    %196 = vmatprep.subr.mxu0 0.0
    %197 = vmatpush1.msra.mxu0 0.0
    %198 = vmatprep.subr.mxu0 0.0
    %199 = vmatpush1.msra.mxu0 0.0
    %200 = vmatprep.subr.mxu0 0.0
    %201 = vmatpush1.msra.mxu0 0.0
    %202 = vmatprep.subr.mxu0 0.0
    %203 = vmatpush1.msra.mxu0 0.0
    %204 = vmatprep.subr.mxu0 0.0
    %205 = vmatpush1.msra.mxu0 0.0
    %206 = vmatprep.subr.mxu0 0.0
    %207 = vmatpush1.msra.mxu0 0.0
    %208 = vmatprep.subr.mxu0 0.0
    %209 = vmatpush1.msra.mxu0 0.0
    %210 = vmatprep.subr.mxu0 0.0
    %211 = vmatpush1.msra.mxu0 0.0
    %212 = vmatprep.subr.mxu0 0.0
    %213 = vmatpush1.msra.mxu0 0.0
    %214 = vmatprep.subr.mxu0 0.0
    %215 = vmatpush1.msra.mxu0 0.0
    %216 = vmatprep.subr.mxu0 0.0
    %217 = vmatpush1.msra.mxu0 0.0
    %218 = vmatprep.subr.mxu0 0.0
    %219 = vmatpush1.msra.mxu0 0.0
    %220 = vmatprep.subr.mxu0 0.0
    %221 = vmatpush1.msra.mxu0 0.0
    %222 = vmatprep.subr.mxu0 0.0
    %223 = vmatpush1.msra.mxu0 0.0
    %224 = vmatprep.subr.mxu0 0.0
    %225 = vmatpush1.msra.mxu0 0.0
    %226 = vmatprep.subr.mxu0 0.0
    %227 = vmatpush1.msra.mxu0 0.0
    %228 = vmatprep.subr.mxu0 0.0
    %229 = vmatpush1.msra.mxu0 0.0
    %230 = vmatprep.mubr.f32.mxu0 0.0
    %231 = vmatmul.mubr.f32.gmra.mrb[0].mxu0 %v164
    %v232 = vpop.f32.mrb[0].mxu0
    %v233 = vadd.f32 %v160, %v232
    %v234 = vpop.f32.mrb[0].mxu0
    %235 = vdwg.mxu0
    %v236 = vmul.f32 %v233, 2.0
    %v237 = vtanh.pop %v236
    %238 = vst [vmem:[#allocation8] sm:$0xff] %v237
    // Predicated region
    $region34: #{tpu_custom_call.1} parent=1 // pred_check
      _
    $region35: #{tpu_custom_call.1} parent=1 // pred_check_branch
      %240 = sbr.rel (0) target = $region37
    $region36: #{tpu_custom_call.1} parent=1 // pred_region
      %s242 = ssub.s32 128, 128
      %243 = vsyncadd [#allocation4], %s242
      %s245 = sshll.u32 [#allocation8], 4
      %s246 = int_to_ptr.vmem [resolvable:$true] %s245
      %248 = dma.vmem_to_hbm [thread:$0]  %s246, 128, %s5, [#allocation4]
    $region37: #{tpu_custom_call.1} parent=1 // pred_fallthru
      _
    // Predicated region
    $region38: #{tpu_custom_call.1} parent=1 // pred_check
      _
    $region39: #{tpu_custom_call.1} parent=1 // pred_check_branch
      %250 = sbr.rel (0) target = $region41
    $region40: #{tpu_custom_call.1} parent=1 // pred_region
      %251 = dma.done [#allocation4], 128
    $region41: #{tpu_custom_call.1} parent=1 // pred_fallthru
      _
    %252 = vsyncpa [#allocation3], 1
    %253 = vsyncpa [#allocation6], 1
    %254 = vsyncpa [#allocation4], 1

</llo_original>
